<compile_context>
chip_gen: v6e
topology: v6e:2x2x1
jax: 0.10.0
libtpu: 0.0.40
codegen_flags: <defaults>
</compile_context>

<pallas_src>
import math

import jax
import jax.numpy as jnp
from jax.experimental import pallas as pl
from jax.experimental.pallas import tpu as pltpu


def _add_pos_kernel(x_ref, pe_ref, o_ref):
    # x_ref / o_ref: (tb, tn)   pe_ref: (1, tn)
    # Pure VPU broadcast-add over the sublane (batch) axis; memory-bound.
    o_ref[...] = x_ref[...] + pe_ref[...]


def _is_v7x():
    """Best-effort chip detection; only used for megacore (2-TC) gating."""
    try:
        kind = jax.devices()[0].device_kind.lower()
    except Exception:
        return False
    return "v7" in kind


def _choose_tiles(B, N, itemsize, block_budget, want_two_steps):
    """Pick (tb, tn) so that:
       * tb is a multiple of the dtype's sublane count, or exactly B,
       * tn is a multiple of 128, or exactly N,
       * tb * tn * itemsize <= block_budget (sweet-spot sized blocks),
       * on v7x (want_two_steps) the grid has >= 2 steps when worthwhile."""
    sub = max(8, 32 // itemsize)          # sublane multiple: 8 f32, 16 bf16, 32 i8
    row_bytes = N * itemsize
    total_bytes = B * row_bytes

    if sub * row_bytes <= block_budget:
        # Full rows fit: keep the row whole (tn = N) and grow the batch tile.
        tn = N
        tb_cap = block_budget // row_bytes
        if tb_cap >= B:
            tb = B
        else:
            tb = max(sub, (tb_cap // sub) * sub)
    else:
        # One sublane-group of rows is already too big: tile the flattened
        # feature axis in lane-dense multiples of 128.
        tb = B if B < sub else sub
        tn_cap = (block_budget // (tb * itemsize)) // 128 * 128
        tn = N if tn_cap >= N else max(128, tn_cap)

    # v7x megacore: want >= 2 "parallel" steps so the two TensorCores split
    # the work -- only when there is enough data for the split to pay off.
    if want_two_steps and total_bytes >= (1 << 20):
        n_steps = pl.cdiv(B, tb) * pl.cdiv(N, tn)
        if n_steps < 2:
            if B >= 2 * sub:
                tb = sub * max(1, pl.cdiv(B, 2 * sub))
            elif tn == N and N >= 2 * 128:
                tn_half = 128 * pl.cdiv(pl.cdiv(N, 2), 128)
                if tn_half < N:
                    tn = tn_half

    return tb, tn


def sinusoidal_positional_embedding(x, *, block_budget_bytes=4 << 20,
                                    donate_x=False):
    """x: (B, S, D) -> (B, S, D), adds the sinusoidal positional embedding."""
    B, S, D = x.shape
    assert D % 2 == 0, "model_dim must be even"
    N = S * D
    itemsize = jnp.dtype(x.dtype).itemsize

    # Batch-invariant sinusoidal table, hoisted out of the kernel grid loop,
    # flattened so the kernel's trailing axis is lane-dense (S*D).
    div_term = jnp.exp(
        jnp.arange(0, D, 2, dtype=jnp.float32) * -(math.log(10000.0) / D)
    )                                                      # (D/2,)
    position = jnp.arange(S, dtype=jnp.float32)[:, None]   # (S, 1)
    angles = position * div_term[None, :]                  # (S, D/2)
    pe = jnp.concatenate([jnp.sin(angles), jnp.cos(angles)], axis=-1)  # (S, D)
    pe_flat = pe.reshape(1, N).astype(x.dtype)

    x_flat = x.reshape(B, N)

    tb, tn = _choose_tiles(B, N, itemsize,
                           block_budget=block_budget_bytes,
                           want_two_steps=_is_v7x())
    # Outer axis = feature tiles, inner axis = batch tiles -> the PE block
    # index only changes on the outer axis, so PE stays resident across the
    # inner batch loop (no re-DMA).
    grid = (pl.cdiv(N, tn), pl.cdiv(B, tb))

    extra = {}
    if donate_x:
        # Optional: reuse x's HBM buffer for the output (add-in-place).
        extra["input_output_aliases"] = {0: 0}

    out_flat = pl.pallas_call(
        _add_pos_kernel,
        out_shape=jax.ShapeDtypeStruct((B, N), x.dtype),
        grid_spec=pltpu.PrefetchScalarGridSpec(
            num_scalar_prefetch=0,
            grid=grid,
            in_specs=[
                pl.BlockSpec((tb, tn), lambda n, b: (b, n)),
                pl.BlockSpec((1, tn), lambda n, b: (0, n)),
            ],
            out_specs=pl.BlockSpec((tb, tn), lambda n, b: (b, n)),
        ),
        compiler_params=pltpu.CompilerParams(
            dimension_semantics=("parallel", "parallel"),
            vmem_limit_bytes=48 << 20,
        ),
        **extra,
    )(x_flat, pe_flat)

    return out_flat.reshape(B, S, D)


def sinusoidal_positional_embedding_ref(x):
    """Pure-JAX reference mirroring the PyTorch forward."""
    B, S, D = x.shape
    div_term = jnp.exp(
        jnp.arange(0, D, 2, dtype=jnp.float32) * -(math.log(10000.0) / D)
    )
    position = jnp.arange(S, dtype=jnp.float32)[:, None]
    sin_emb = jnp.sin(position * div_term)
    cos_emb = jnp.cos(position * div_term)
    # rearrange([sin, cos], 'd seq half -> seq (d half)') == concat([sin, cos], -1)
    pe = jnp.concatenate([sin_emb, cos_emb], axis=-1)      # (S, D)
    return x + pe[None, :, :].astype(x.dtype)


if __name__ == "__main__":
    # Small shapes consistent with the module: (batch, seq, model_dim).
    B, S, D = 2, 8, 32
    key = jax.random.PRNGKey(0)
    x = jax.random.normal(key, (B, S, D), dtype=jnp.float32)

    out = sinusoidal_positional_embedding(x)
    out = jax.block_until_ready(out)
    ref = sinusoidal_positional_embedding_ref(x)
    assert out.shape == (B, S, D), out.shape
    assert jnp.allclose(out, ref, atol=1e-5, rtol=1e-5), "mismatch vs reference"

    # Second check: force a tiny block budget to exercise the 2-D (ragged)
    # tiling path: B=10 (ragged, non-multiple-of-8 batch) x N=768 with
    # (8, 256) blocks and a grid of (3, 2).
    B2, S2, D2 = 10, 16, 48
    x2 = jax.random.normal(jax.random.PRNGKey(1), (B2, S2, D2), dtype=jnp.float32)
    out2 = jax.block_until_ready(
        sinusoidal_positional_embedding(x2, block_budget_bytes=8 << 10)
    )
    ref2 = sinusoidal_positional_embedding_ref(x2)
    assert jnp.allclose(out2, ref2, atol=1e-5, rtol=1e-5), "tiled-path mismatch"

    print("KERNEL_OK")
</pallas_src>

<mosaic_0001>
module attributes {stable_mosaic.version = 11 : i64} {
  func.func @_add_pos_kernel(%arg0: i32, %arg1: i32, %arg2: memref<2x256xf32, #tpu.memory_space<vmem>>, %arg3: memref<1x256xf32, #tpu.memory_space<vmem>>, %arg4: memref<2x256xf32, #tpu.memory_space<vmem>>) attributes {dimension_semantics = [#tpu.dimension_semantics<parallel>, #tpu.dimension_semantics<parallel>], iteration_bounds = array<i64: 1, 1>, scalar_prefetch = 0 : i64, scratch_operands = 0 : i64, tpu.core_type = #tpu.core_type<tc>, window_params = [{transform_indices = @transform_0, window_bounds = array<i64: 2, 256>}, {transform_indices = @transform_1, window_bounds = array<i64: 1, 256>}, {transform_indices = @transform_2, window_bounds = array<i64: 2, 256>}]} {
    %c0 = arith.constant 0 : index
    %c0_0 = arith.constant 0 : index
    %0 = vector.load %arg2[%c0, %c0_0] : memref<2x256xf32, #tpu.memory_space<vmem>>, vector<2x256xf32>
    %c0_1 = arith.constant 0 : index
    %c0_2 = arith.constant 0 : index
    %1 = vector.load %arg3[%c0_1, %c0_2] : memref<1x256xf32, #tpu.memory_space<vmem>>, vector<1x256xf32>
    %2 = vector.broadcast %1 : vector<1x256xf32> to vector<2x256xf32>
    %3 = arith.addf %0, %2 : vector<2x256xf32>
    %c0_3 = arith.constant 0 : index
    %c0_4 = arith.constant 0 : index
    %4 = vector.load %arg4[%c0_3, %c0_4] : memref<2x256xf32, #tpu.memory_space<vmem>>, vector<2x256xf32>
    tpu.vector_store %arg4[%c0_3, %c0_4], %3 {strides = array<i32>} : memref<2x256xf32, #tpu.memory_space<vmem>>, vector<2x256xf32>,
    return
  }
  func.func @transform_0(%arg0: i32, %arg1: i32) -> (i32, i32) {
    %c0_i32 = arith.constant 0 : i32
    return %arg1, %arg0 : i32, i32
  }
  func.func @transform_1(%arg0: i32, %arg1: i32) -> (i32, i32) {
    %c0_i32 = arith.constant 0 : i32
    %c0_i32_0 = arith.constant 0 : i32
    return %c0_i32, %arg0 : i32, i32
  }
  func.func @transform_2(%arg0: i32, %arg1: i32) -> (i32, i32) {
    %c0_i32 = arith.constant 0 : i32
    return %arg1, %arg0 : i32, i32
  }
}

</mosaic_0001>

<llo_original>
// kernel: tpu_custom_call.1
$region0: #{tpu_custom_call.1}
  #allocation0 [shape = 'u32[]', space=smem, size = 0x4, offset = 0x4, fixed_abs, tag = 'smem constant byte address 0x4 - core index']
  #allocation1 [shape = 'u32[144,128]{1,0:T(1,128)}', space=vmem, size = 0x12000, scoped, tag = 'internal scratch']
  %s0 = inlined_call_operand.hbm [shape: f32[2,256], index: 0, kind: input, shape index: {}]
  %s1 = inlined_call_operand.hbm [shape: f32[1,256], index: 1, kind: input, shape index: {}]
  %s2 = inlined_call_operand.hbm [shape: f32[2,256], index: 2, kind: output, shape index: {}]
  %s3 = sld [smem:[#allocation0]]
  $region26: #{tpu_custom_call.1} parent=0
    _
  %s5 = ssub.s32 1, %s3
  %s6 = scalar_select 0, %s5, %s3
  $region1: #{tpu_custom_call.1} parent=0
    #allocation2 [shape = 'u8[2048]{0}', space=vmem, size = 0x800, scoped, tag = 'input window, operand 0, single buffered']
    #allocation3 [shape = 's32[1]{0}', space=sflag, size = 0x4, scoped, tag = 'scoped memory for tpu_custom_call.1']
    #allocation4 [shape = 's32[1]{0}', space=sflag, size = 0x4, scoped, tag = 'scoped memory for tpu_custom_call.1']
    #allocation5 [shape = 'u8[1024]{0}', space=vmem, size = 0x400, scoped, tag = 'input window, operand 1, single buffered']
    #allocation6 [shape = 's32[1]{0}', space=sflag, size = 0x4, scoped, tag = 'scoped memory for tpu_custom_call.1']
    #allocation7 [shape = 'u8[2048]{0}', space=vmem, size = 0x800, scoped, tag = 'output window, operand 0, single buffered']
    %7 = vsyncpa [#allocation3], 0
    %8 = vsyncpa [#allocation6], 0
    %9 = vsyncpa [#allocation4], 0
    // Predicated region
    $region2: #{tpu_custom_call.1} parent=1 // pred_check
      _
    $region3: #{tpu_custom_call.1} parent=1 // pred_check_branch
      %11 = sbr.rel (0) target = $region5
    $region4: #{tpu_custom_call.1} parent=1 // pred_region
      %s13 = ssub.s32 64, 64
      %14 = vsyncadd [#allocation3], %s13
      %s16 = sshll.u32 [#allocation2], 4
      %s17 = int_to_ptr.vmem [resolvable:$true] %s16
      %19 = dma.hbm_to_vmem [thread:$0]  %s0, 64, %s17, [#allocation3]
    $region5: #{tpu_custom_call.1} parent=1 // pred_fallthru
      _
    // Predicated region
    $region6: #{tpu_custom_call.1} parent=1 // pred_check
      _
    $region7: #{tpu_custom_call.1} parent=1 // pred_check_branch
      %21 = sbr.rel (0) target = $region9
    $region8: #{tpu_custom_call.1} parent=1 // pred_region
      %s23 = ssub.s32 32, 32
      %24 = vsyncadd [#allocation6], %s23
      %s26 = sshll.u32 [#allocation5], 4
      %s27 = int_to_ptr.vmem [resolvable:$true] %s26
      %29 = dma.hbm_to_vmem [thread:$0]  %s1, 32, %s27, [#allocation6]
    $region9: #{tpu_custom_call.1} parent=1 // pred_fallthru
      _
    // Predicated region
    $region10: #{tpu_custom_call.1} parent=1 // pred_check
      _
    $region11: #{tpu_custom_call.1} parent=1 // pred_check_branch
      %31 = sbr.rel (0) target = $region13
    $region12: #{tpu_custom_call.1} parent=1 // pred_region
      %32 = dma.done [#allocation3], 64
    $region13: #{tpu_custom_call.1} parent=1 // pred_fallthru
      _
    // Predicated region
    $region14: #{tpu_custom_call.1} parent=1 // pred_check
      _
    $region15: #{tpu_custom_call.1} parent=1 // pred_check_branch
      %34 = sbr.rel (0) target = $region17
    $region16: #{tpu_custom_call.1} parent=1 // pred_region
      %35 = dma.done [#allocation6], 32
    $region17: #{tpu_custom_call.1} parent=1 // pred_fallthru
      _
    %v36 = vld [vmem:[#allocation2] sm:$0xf]
    %v37 = vld [vmem:[#allocation5] sm:$0x3]
    %v39 = vlaneseq
    %v40 = vshrl.u32 %v39, 7
    %v41 = vsub.s32 0, %v40
    %v42 = vrot.slane %v37, %v41
    %v43 = vlaneseq
    %v44 = vshrl.u32 %v43, 7
    %v45 = vsub.s32 1, %v44
    %v46 = vrot.slane %v37, %v45
    %v47 = vcombine.low %v42, %v46
    %v49 = vunpack.c.l.s4 1983009808
    %v50 = vunpack.c.0.s8 %v49
    %v51 = vlaneseq
    %v52 = vshrl.u32 %v51, 7
    %v53 = vsub.s32 %v50, %v52
    %v54 = vrot.slane %v47, %v53
    %v56 = vadd.f32 %v36, %v54
    %57 = vst [vmem:[#allocation7] sm:$0xf] %v56
    // Predicated region
    $region18: #{tpu_custom_call.1} parent=1 // pred_check
      _
    $region19: #{tpu_custom_call.1} parent=1 // pred_check_branch
      %59 = sbr.rel (0) target = $region21
    $region20: #{tpu_custom_call.1} parent=1 // pred_region
      %s61 = ssub.s32 64, 64
      %62 = vsyncadd [#allocation4], %s61
      %s64 = sshll.u32 [#allocation7], 4
      %s65 = int_to_ptr.vmem [resolvable:$true] %s64
      %67 = dma.vmem_to_hbm [thread:$0]  %s65, 64, %s2, [#allocation4]
    $region21: #{tpu_custom_call.1} parent=1 // pred_fallthru
      _
    // Predicated region
    $region22: #{tpu_custom_call.1} parent=1 // pred_check
      _
    $region23: #{tpu_custom_call.1} parent=1 // pred_check_branch
      %69 = sbr.rel (0) target = $region25
    $region24: #{tpu_custom_call.1} parent=1 // pred_region
      %70 = dma.done [#allocation4], 64
    $region25: #{tpu_custom_call.1} parent=1 // pred_fallthru
      _
    %71 = vsyncpa [#allocation3], 1
    %72 = vsyncpa [#allocation6], 1
    %73 = vsyncpa [#allocation4], 1

</llo_original>
